<compile_context>
chip_gen: v5e
topology: v5e:2x2
jax: 0.10.0
libtpu: 0.0.40
codegen_flags: <defaults>
</compile_context>

<pallas_src>
import functools
import math

import jax
import jax.numpy as jnp
from jax.experimental import pallas as pl
from jax.experimental.pallas import tpu as pltpu


# ----------------------------------------------------------------------------
# Kernel 1: fused im2col + single K=k*k*Cin bf16 MXU matmul + BN-stats epilogue.
# One grid step == one image.  Whole K per step, no scratch, direct writes.
# ----------------------------------------------------------------------------
def _conv_bnstats_kernel(x_ref, w_ref, y_ref, sum_ref, sq_ref,
                         *, Hout, Wout, Cin, Cout, k, dilation):
    # x_ref:   (1, Hp, Wp, Cin)   zero-padded NHWC tile for one image (f32)
    # w_ref:   (k*k*Cin, Cout)    im2col-ordered conv weight (bf16)
    # y_ref:   (1, Hout*Wout, Cout)  conv output (pre-BN), bf16
    # sum_ref: (1, 1, Cout)       per-image channel sum (f32)
    # sq_ref:  (1, 1, Cout)       per-image channel sum of squares (f32)
    d = dilation
    x = x_ref[0]                                   # (Hp, Wp, Cin)
    taps = []
    for kh in range(k):
        for kw in range(k):
            t = x[kh * d:kh * d + Hout, kw * d:kw * d + Wout, :]   # (Hout, Wout, Cin)
            taps.append(t.reshape(Hout * Wout, Cin))
    # im2col tile, K ordered (kh, kw, cin) to match the wrapper-reshaped weight.
    a = jnp.concatenate(taps, axis=-1).astype(jnp.bfloat16)        # (HW, k*k*Cin)
    acc = jnp.dot(a, w_ref[...], preferred_element_type=jnp.float32)  # (HW, Cout) f32
    # BN statistics from the f32 accumulator, *before* the bf16 downcast of y.
    sum_ref[0] = jnp.sum(acc, axis=0, keepdims=True)       # (1, Cout)
    sq_ref[0] = jnp.sum(acc * acc, axis=0, keepdims=True)  # (1, Cout)
    y_ref[0] = acc.astype(jnp.bfloat16)


# ----------------------------------------------------------------------------
# Kernel 2: lane-dense BatchNorm affine + ReLU (scale/shift precomputed in glue).
# ----------------------------------------------------------------------------
def _bn_relu_kernel(y_ref, scale_ref, shift_ref, o_ref):
    # y_ref: (1, Hout, Wout*Cout) bf16; scale/shift: (1, Wout*Cout) f32
    y = y_ref[0].astype(jnp.float32)
    o_ref[0] = jnp.maximum(y * scale_ref[...] + shift_ref[...], 0.0)


# ----------------------------------------------------------------------------
# Plain-JAX glue
# ----------------------------------------------------------------------------
def max_pool2x2_ceil(x_nhwc):
    """F.max_pool2d(kernel_size=2, stride=2, ceil_mode=True) on NHWC."""
    N, H, W, C = x_nhwc.shape
    Ho, Wo = -(-H // 2), -(-W // 2)
    xp = jnp.pad(x_nhwc, ((0, 0), (0, Ho * 2 - H), (0, Wo * 2 - W), (0, 0)),
                 constant_values=-jnp.inf)
    return jnp.max(xp.reshape(N, Ho, 2, Wo, 2, C), axis=(2, 4))


# ----------------------------------------------------------------------------
# Public forward (NCHW in / NCHW out), matching DownConvBNReLU semantics:
#  - optional ceil-mode 2x2 max-pool
#  - Conv2d(kernel_size, padding = k//2 if dilation==1 else dilation,
#           dilation, bias=False since norm_layer is BatchNorm2d)
#  - BatchNorm2d in train mode (per-batch biased stats, eps=1e-5)
#  - ReLU
# ----------------------------------------------------------------------------
def down_conv_bn_relu(x_nchw, params, *, kernel_size=3, dilation=1,
                      down_flag=True, eps=1e-5):
    w, gamma, beta = params['w'], params['gamma'], params['beta']
    Cout, Cin, k, _ = w.shape
    assert k == kernel_size

    x = jnp.transpose(x_nchw, (0, 2, 3, 1)).astype(jnp.float32)   # NHWC
    if down_flag:
        x = max_pool2x2_ceil(x)
    N, H, W, _ = x.shape

    pad = kernel_size // 2 if dilation == 1 else dilation
    xp = jnp.pad(x, ((0, 0), (pad, pad), (pad, pad), (0, 0)))     # conv zero-pad
    Hp, Wp = H + 2 * pad, W + 2 * pad
    Hout = H + 2 * pad - dilation * (k - 1)
    Wout = W + 2 * pad - dilation * (k - 1)
    HW = Hout * Wout
    KK = k * k * Cin

    # torch (Cout, Cin, kh, kw) -> im2col order (kh, kw, cin) x Cout, bf16.
    w2 = jnp.transpose(w, (2, 3, 1, 0)).reshape(KK, Cout).astype(jnp.bfloat16)

    conv_kernel = functools.partial(_conv_bnstats_kernel, Hout=Hout, Wout=Wout,
                                    Cin=Cin, Cout=Cout, k=k, dilation=dilation)
    y, ysum, ysq = pl.pallas_call(
        conv_kernel,
        out_shape=(jax.ShapeDtypeStruct((N, HW, Cout), jnp.bfloat16),
                   jax.ShapeDtypeStruct((N, 1, Cout), jnp.float32),
                   jax.ShapeDtypeStruct((N, 1, Cout), jnp.float32)),
        grid=(N,),
        in_specs=[pl.BlockSpec((1, Hp, Wp, Cin), lambda n: (n, 0, 0, 0)),
                  pl.BlockSpec((KK, Cout), lambda n: (0, 0))],
        out_specs=(pl.BlockSpec((1, HW, Cout), lambda n: (n, 0, 0)),
                   pl.BlockSpec((1, 1, Cout), lambda n: (n, 0, 0)),
                   pl.BlockSpec((1, 1, Cout), lambda n: (n, 0, 0))),
        compiler_params=pltpu.CompilerParams(
            dimension_semantics=("parallel",),
            vmem_limit_bytes=32 * 1024 * 1024),
    )(xp, w2)

    # Tiny (Cout,)-sized glue: batch statistics -> per-channel scale/shift.
    count = float(N * HW)
    sum_c = jnp.sum(ysum, axis=0)[0]                  # (Cout,)
    sq_c = jnp.sum(ysq, axis=0)[0]                    # (Cout,)
    mean = sum_c / count
    var = sq_c / count - mean * mean                  # biased train-mode variance
    scale = gamma.astype(jnp.float32) * jax.lax.rsqrt(var + eps)
    shift = beta.astype(jnp.float32) - mean * scale
    WC = Wout * Cout
    scale_t = jnp.tile(scale, Wout).reshape(1, WC)    # lane index = w*Cout + c
    shift_t = jnp.tile(shift, Wout).reshape(1, WC)

    # Free contiguous relayout: (N, HW, Cout) == (N, Hout, Wout*Cout) bytes,
    # so kernel 2 streams lane-dense (>=128-wide) rows on read and write.
    y_ld = y.reshape(N, Hout, WC)

    out = pl.pallas_call(
        _bn_relu_kernel,
        out_shape=jax.ShapeDtypeStruct((N, Hout, WC), jnp.float32),
        grid=(N,),
        in_specs=[pl.BlockSpec((1, Hout, WC), lambda n: (n, 0, 0)),
                  pl.BlockSpec((1, WC), lambda n: (0, 0)),
                  pl.BlockSpec((1, WC), lambda n: (0, 0))],
        out_specs=pl.BlockSpec((1, Hout, WC), lambda n: (n, 0, 0)),
        compiler_params=pltpu.CompilerParams(
            dimension_semantics=("parallel",),
            vmem_limit_bytes=32 * 1024 * 1024),
    )(y_ld, scale_t, shift_t)

    out = out.reshape(N, Hout, Wout, Cout)
    return jnp.transpose(out, (0, 3, 1, 2))                       # back to NCHW


# ----------------------------------------------------------------------------
# Pure-JAX reference (mirrors the PyTorch forward) for a correctness check.
# ----------------------------------------------------------------------------
def reference_forward(x_nchw, params, *, kernel_size=3, dilation=1,
                      down_flag=True, eps=1e-5):
    x = x_nchw
    if down_flag:
        N, C, H, W = x.shape
        Ho, Wo = -(-H // 2), -(-W // 2)
        xpad = jnp.pad(x, ((0, 0), (0, 0), (0, Ho * 2 - H), (0, Wo * 2 - W)),
                       constant_values=-jnp.inf)
        x = jnp.max(xpad.reshape(N, C, Ho, 2, Wo, 2), axis=(3, 5))
    pad = kernel_size // 2 if dilation == 1 else dilation
    y = jax.lax.conv_general_dilated(
        x, params['w'], window_strides=(1, 1),
        padding=((pad, pad), (pad, pad)), rhs_dilation=(dilation, dilation),
        dimension_numbers=('NCHW', 'OIHW', 'NCHW'),
        precision=jax.lax.Precision.HIGHEST)
    mean = jnp.mean(y, axis=(0, 2, 3), keepdims=True)
    var = jnp.mean(jnp.square(y - mean), axis=(0, 2, 3), keepdims=True)
    yhat = (y - mean) * jax.lax.rsqrt(var + eps)
    yhat = yhat * params['gamma'].reshape(1, -1, 1, 1) \
           + params['beta'].reshape(1, -1, 1, 1)
    return jnp.maximum(yhat, 0.0)


# ----------------------------------------------------------------------------
if __name__ == "__main__":
    INPUT_NC, OUTPUT_NC = 4, 16
    B, HS, WS = 2, 16, 16

    key = jax.random.PRNGKey(0)
    kx, kw = jax.random.split(key)
    fan_in = INPUT_NC * 3 * 3
    params = {
        'w': jax.random.normal(kw, (OUTPUT_NC, INPUT_NC, 3, 3),
                               jnp.float32) / math.sqrt(fan_in),
        'gamma': jnp.ones((OUTPUT_NC,), jnp.float32),   # fresh BatchNorm2d init
        'beta': jnp.zeros((OUTPUT_NC,), jnp.float32),
    }
    x = jax.random.normal(kx, (B, INPUT_NC, HS, WS), dtype=jnp.float32)

    configs = [dict(dilation=1, down_flag=True),    # DownConvBNReLU defaults
               dict(dilation=2, down_flag=False)]   # dilated / no-pool branch
    for cfg in configs:
        fwd = jax.jit(lambda xx, c=cfg: down_conv_bn_relu(xx, params, **c))
        out = jax.block_until_ready(fwd(x))
        ref = jax.block_until_ready(reference_forward(x, params, **cfg))
        assert out.shape == ref.shape, (out.shape, ref.shape)
        assert bool(jnp.all(jnp.isfinite(out)))
        err = float(jnp.max(jnp.abs(out - ref)))
        assert err < 3e-2, f"max abs err {err} (cfg={cfg})"

    print("KERNEL_OK")
</pallas_src>

<mosaic_0001>
module attributes {stable_mosaic.version = 11 : i64} {
  func.func @_conv_bnstats_kernel(%arg0: i32, %arg1: memref<1x10x10x4xf32, #tpu.memory_space<vmem>>, %arg2: memref<36x16xbf16, #tpu.memory_space<vmem>>, %arg3: memref<1x64x16xbf16, #tpu.memory_space<vmem>>, %arg4: memref<1x1x16xf32, #tpu.memory_space<vmem>>, %arg5: memref<1x1x16xf32, #tpu.memory_space<vmem>>) attributes {dimension_semantics = [#tpu.dimension_semantics<parallel>], iteration_bounds = array<i64: 2>, scalar_prefetch = 0 : i64, scratch_operands = 0 : i64, tpu.core_type = #tpu.core_type<tc>, window_params = [{transform_indices = @transform_0, window_bounds = array<i64: 1, 10, 10, 4>}, {pipeline_mode = #tpu.pipeline_mode<synchronous>, transform_indices = @transform_1, window_bounds = array<i64: 36, 16>}, {transform_indices = @transform_2, window_bounds = array<i64: 1, 64, 16>}, {transform_indices = @transform_3, window_bounds = array<i64: 1, 1, 16>}, {transform_indices = @transform_4, window_bounds = array<i64: 1, 1, 16>}]} {
    %c0 = arith.constant 0 : index
    %c0_0 = arith.constant 0 : index
    %c0_1 = arith.constant 0 : index
    %c0_2 = arith.constant 0 : index
    %0 = vector.load %arg1[%c0, %c0_0, %c0_1, %c0_2] : memref<1x10x10x4xf32, #tpu.memory_space<vmem>>, vector<1x10x10x4xf32>
    %1 = vector.shape_cast %0 : vector<1x10x10x4xf32> to vector<10x10x4xf32>
    %2 = vector.extract_strided_slice %1 {offsets = [0, 0, 0], sizes = [8, 8, 4], strides = [1, 1, 1]} : vector<10x10x4xf32> to vector<8x8x4xf32>
    %3 = vector.shape_cast %2 : vector<8x8x4xf32> to vector<64x4xf32>
    %4 = vector.extract_strided_slice %1 {offsets = [0, 1, 0], sizes = [8, 8, 4], strides = [1, 1, 1]} : vector<10x10x4xf32> to vector<8x8x4xf32>
    %5 = vector.shape_cast %4 : vector<8x8x4xf32> to vector<64x4xf32>
    %6 = vector.extract_strided_slice %1 {offsets = [0, 2, 0], sizes = [8, 8, 4], strides = [1, 1, 1]} : vector<10x10x4xf32> to vector<8x8x4xf32>
    %7 = vector.shape_cast %6 : vector<8x8x4xf32> to vector<64x4xf32>
    %8 = vector.extract_strided_slice %1 {offsets = [1, 0, 0], sizes = [8, 8, 4], strides = [1, 1, 1]} : vector<10x10x4xf32> to vector<8x8x4xf32>
    %9 = vector.shape_cast %8 : vector<8x8x4xf32> to vector<64x4xf32>
    %10 = vector.extract_strided_slice %1 {offsets = [1, 1, 0], sizes = [8, 8, 4], strides = [1, 1, 1]} : vector<10x10x4xf32> to vector<8x8x4xf32>
    %11 = vector.shape_cast %10 : vector<8x8x4xf32> to vector<64x4xf32>
    %12 = vector.extract_strided_slice %1 {offsets = [1, 2, 0], sizes = [8, 8, 4], strides = [1, 1, 1]} : vector<10x10x4xf32> to vector<8x8x4xf32>
    %13 = vector.shape_cast %12 : vector<8x8x4xf32> to vector<64x4xf32>
    %14 = vector.extract_strided_slice %1 {offsets = [2, 0, 0], sizes = [8, 8, 4], strides = [1, 1, 1]} : vector<10x10x4xf32> to vector<8x8x4xf32>
    %15 = vector.shape_cast %14 : vector<8x8x4xf32> to vector<64x4xf32>
    %16 = vector.extract_strided_slice %1 {offsets = [2, 1, 0], sizes = [8, 8, 4], strides = [1, 1, 1]} : vector<10x10x4xf32> to vector<8x8x4xf32>
    %17 = vector.shape_cast %16 : vector<8x8x4xf32> to vector<64x4xf32>
    %18 = vector.extract_strided_slice %1 {offsets = [2, 2, 0], sizes = [8, 8, 4], strides = [1, 1, 1]} : vector<10x10x4xf32> to vector<8x8x4xf32>
    %19 = vector.shape_cast %18 : vector<8x8x4xf32> to vector<64x4xf32>
    %20 = tpu.concatenate %3, %5, %7, %9, %11, %13, %15, %17, %19 in 1 : vector<64x4xf32>, vector<64x4xf32>, vector<64x4xf32>, vector<64x4xf32>, vector<64x4xf32>, vector<64x4xf32>, vector<64x4xf32>, vector<64x4xf32>, vector<64x4xf32> -> vector<64x36xf32>
    %21 = arith.truncf %20 : vector<64x36xf32> to vector<64x36xbf16>
    %c0_3 = arith.constant 0 : index
    %c0_4 = arith.constant 0 : index
    %22 = vector.load %arg2[%c0_3, %c0_4] : memref<36x16xbf16, #tpu.memory_space<vmem>>, vector<36x16xbf16>
    %cst = arith.constant dense<0.000000e+00> : vector<64x16xf32>
    %23 = tpu.matmul %21, %22, %cst {dimension_numbers = #tpu.dot_dimension_numbers<[1], [0], [0], [1], [0, 0, 1, 1], [], []>} : vector<64x36xbf16>, vector<36x16xbf16>, vector<64x16xf32> -> vector<64x16xf32>
    %cst_5 = arith.constant dense<0.000000e+00> : vector<16xf32>
    %24 = vector.multi_reduction <add>, %23, %cst_5 [0] : vector<64x16xf32> to vector<16xf32>
    %25 = vector.shape_cast %24 : vector<16xf32> to vector<1x16xf32>
    %c0_6 = arith.constant 0 : index
    %c0_7 = arith.constant 0 : index
    %c0_8 = arith.constant 0 : index
    %26 = vector.load %arg4[%c0_6, %c0_7, %c0_8] : memref<1x1x16xf32, #tpu.memory_space<vmem>>, vector<1x1x16xf32>
    %27 = vector.shape_cast %26 : vector<1x1x16xf32> to vector<1x16xf32>
    %28 = vector.shape_cast %25 : vector<1x16xf32> to vector<1x1x16xf32>
    tpu.vector_store %arg4[%c0_6, %c0_7, %c0_8], %28 {strides = array<i32>} : memref<1x1x16xf32, #tpu.memory_space<vmem>>, vector<1x1x16xf32>,
    %29 = arith.mulf %23, %23 : vector<64x16xf32>
    %cst_9 = arith.constant dense<0.000000e+00> : vector<16xf32>
    %30 = vector.multi_reduction <add>, %29, %cst_9 [0] : vector<64x16xf32> to vector<16xf32>
    %31 = vector.shape_cast %30 : vector<16xf32> to vector<1x16xf32>
    %c0_10 = arith.constant 0 : index
    %c0_11 = arith.constant 0 : index
    %c0_12 = arith.constant 0 : index
    %32 = vector.load %arg5[%c0_10, %c0_11, %c0_12] : memref<1x1x16xf32, #tpu.memory_space<vmem>>, vector<1x1x16xf32>
    %33 = vector.shape_cast %32 : vector<1x1x16xf32> to vector<1x16xf32>
    %34 = vector.shape_cast %31 : vector<1x16xf32> to vector<1x1x16xf32>
    tpu.vector_store %arg5[%c0_10, %c0_11, %c0_12], %34 {strides = array<i32>} : memref<1x1x16xf32, #tpu.memory_space<vmem>>, vector<1x1x16xf32>,
    %35 = arith.truncf %23 : vector<64x16xf32> to vector<64x16xbf16>
    %c0_13 = arith.constant 0 : index
    %c0_14 = arith.constant 0 : index
    %c0_15 = arith.constant 0 : index
    %36 = vector.load %arg3[%c0_13, %c0_14, %c0_15] : memref<1x64x16xbf16, #tpu.memory_space<vmem>>, vector<1x64x16xbf16>
    %37 = vector.shape_cast %36 : vector<1x64x16xbf16> to vector<64x16xbf16>
    %38 = vector.shape_cast %35 : vector<64x16xbf16> to vector<1x64x16xbf16>
    tpu.vector_store %arg3[%c0_13, %c0_14, %c0_15], %38 {strides = array<i32>} : memref<1x64x16xbf16, #tpu.memory_space<vmem>>, vector<1x64x16xbf16>,
    return
  }
  func.func @transform_0(%arg0: i32) -> (i32, i32, i32, i32) {
    %c0_i32 = arith.constant 0 : i32
    %c0_i32_0 = arith.constant 0 : i32
    %c0_i32_1 = arith.constant 0 : i32
    %c0_i32_2 = arith.constant 0 : i32
    return %arg0, %c0_i32, %c0_i32_0, %c0_i32_1 : i32, i32, i32, i32
  }
  func.func @transform_1(%arg0: i32) -> (i32, i32) {
    %c0_i32 = arith.constant 0 : i32
    %c0_i32_0 = arith.constant 0 : i32
    %c0_i32_1 = arith.constant 0 : i32
    return %c0_i32, %c0_i32_0 : i32, i32
  }
  func.func @transform_2(%arg0: i32) -> (i32, i32, i32) {
    %c0_i32 = arith.constant 0 : i32
    %c0_i32_0 = arith.constant 0 : i32
    %c0_i32_1 = arith.constant 0 : i32
    return %arg0, %c0_i32, %c0_i32_0 : i32, i32, i32
  }
  func.func @transform_3(%arg0: i32) -> (i32, i32, i32) {
    %c0_i32 = arith.constant 0 : i32
    %c0_i32_0 = arith.constant 0 : i32
    %c0_i32_1 = arith.constant 0 : i32
    return %arg0, %c0_i32, %c0_i32_0 : i32, i32, i32
  }
  func.func @transform_4(%arg0: i32) -> (i32, i32, i32) {
    %c0_i32 = arith.constant 0 : i32
    %c0_i32_0 = arith.constant 0 : i32
    %c0_i32_1 = arith.constant 0 : i32
    return %arg0, %c0_i32, %c0_i32_0 : i32, i32, i32
  }
}

module attributes {stable_mosaic.version = 11 : i64} {
  func.func @_bn_relu_kernel(%arg0: i32, %arg1: memref<1x8x128xbf16, #tpu.memory_space<vmem>>, %arg2: memref<1x128xf32, #tpu.memory_space<vmem>>, %arg3: memref<1x128xf32, #tpu.memory_space<vmem>>, %arg4: memref<1x8x128xf32, #tpu.memory_space<vmem>>) attributes {dimension_semantics = [#tpu.dimension_semantics<parallel>], iteration_bounds = array<i64: 2>, scalar_prefetch = 0 : i64, scratch_operands = 0 : i64, tpu.core_type = #tpu.core_type<tc>, window_params = [{transform_indices = @transform_0, window_bounds = array<i64: 1, 8, 128>}, {pipeline_mode = #tpu.pipeline_mode<synchronous>, transform_indices = @transform_1, window_bounds = array<i64: 1, 128>}, {pipeline_mode = #tpu.pipeline_mode<synchronous>, transform_indices = @transform_2, window_bounds = array<i64: 1, 128>}, {transform_indices = @transform_3, window_bounds = array<i64: 1, 8, 128>}]} {
    %c0 = arith.constant 0 : index
    %c0_0 = arith.constant 0 : index
    %c0_1 = arith.constant 0 : index
    %0 = vector.load %arg1[%c0, %c0_0, %c0_1] : memref<1x8x128xbf16, #tpu.memory_space<vmem>>, vector<1x8x128xbf16>
    %1 = vector.shape_cast %0 : vector<1x8x128xbf16> to vector<8x128xbf16>
    %2 = arith.extf %1 : vector<8x128xbf16> to vector<8x128xf32>
    %c0_2 = arith.constant 0 : index
    %c0_3 = arith.constant 0 : index
    %3 = vector.load %arg2[%c0_2, %c0_3] : memref<1x128xf32, #tpu.memory_space<vmem>>, vector<1x128xf32>
    %4 = vector.broadcast %3 : vector<1x128xf32> to vector<8x128xf32>
    %5 = arith.mulf %2, %4 : vector<8x128xf32>
    %c0_4 = arith.constant 0 : index
    %c0_5 = arith.constant 0 : index
    %6 = vector.load %arg3[%c0_4, %c0_5] : memref<1x128xf32, #tpu.memory_space<vmem>>, vector<1x128xf32>
    %7 = vector.broadcast %6 : vector<1x128xf32> to vector<8x128xf32>
    %8 = arith.addf %5, %7 : vector<8x128xf32>
    %cst = arith.constant 0.000000e+00 : f32
    %9 = vector.broadcast %cst : f32 to vector<8x128xf32>
    %10 = arith.maximumf %8, %9 : vector<8x128xf32>
    %c0_6 = arith.constant 0 : index
    %c0_7 = arith.constant 0 : index
    %c0_8 = arith.constant 0 : index
    %11 = vector.load %arg4[%c0_6, %c0_7, %c0_8] : memref<1x8x128xf32, #tpu.memory_space<vmem>>, vector<1x8x128xf32>
    %12 = vector.shape_cast %11 : vector<1x8x128xf32> to vector<8x128xf32>
    %13 = vector.shape_cast %10 : vector<8x128xf32> to vector<1x8x128xf32>
    tpu.vector_store %arg4[%c0_6, %c0_7, %c0_8], %13 {strides = array<i32>} : memref<1x8x128xf32, #tpu.memory_space<vmem>>, vector<1x8x128xf32>,
    return
  }
  func.func @transform_0(%arg0: i32) -> (i32, i32, i32) {
    %c0_i32 = arith.constant 0 : i32
    %c0_i32_0 = arith.constant 0 : i32
    %c0_i32_1 = arith.constant 0 : i32
    return %arg0, %c0_i32, %c0_i32_0 : i32, i32, i32
  }
  func.func @transform_1(%arg0: i32) -> (i32, i32) {
    %c0_i32 = arith.constant 0 : i32
    %c0_i32_0 = arith.constant 0 : i32
    %c0_i32_1 = arith.constant 0 : i32
    return %c0_i32, %c0_i32_0 : i32, i32
  }
  func.func @transform_2(%arg0: i32) -> (i32, i32) {
    %c0_i32 = arith.constant 0 : i32
    %c0_i32_0 = arith.constant 0 : i32
    %c0_i32_1 = arith.constant 0 : i32
    return %c0_i32, %c0_i32_0 : i32, i32
  }
  func.func @transform_3(%arg0: i32) -> (i32, i32, i32) {
    %c0_i32 = arith.constant 0 : i32
    %c0_i32_0 = arith.constant 0 : i32
    %c0_i32_1 = arith.constant 0 : i32
    return %arg0, %c0_i32, %c0_i32_0 : i32, i32, i32
  }
}

</mosaic_0001>

<llo_original>
// kernel: tile.18
$region0: #{tile.18}
  #allocation0 [shape = 's32[1]{0}', space=sflag, size = 0x4, scoped, tag = 'scoped memory for tile.18']
  %s0 = inlined_call_operand.vmem [shape: f32[16], index: 0, kind: input, shape index: {}]
  %s1 = inlined_call_operand.vmem [shape: f32[8,16], index: 1, kind: output, shape index: {}]
  // Predicated region
  $region2: #{tile.18} parent=0 // pred_check
    _
  $region3: #{tile.18} parent=0 // pred_check_branch
    %3 = sbr.rel (0) target = $region5
  $region4: #{tile.18} parent=0 // pred_region
    _
  $region5: #{tile.18} parent=0 // pred_fallthru
    _
  %v4 = vld [vmem:[%s0] ss:$0 sm:$0xff]
  %5 = vst [vmem:[%s1] sm:$0xff] %v4

// kernel: tile.19
$region0: #{tile.19}
  %s0 = inlined_call_operand.vmem [shape: f32[8,16], index: 0, kind: input, shape index: {}]
  %s1 = inlined_call_operand.vmem [shape: f32[1,128], index: 1, kind: output, shape index: {}]
  $region1: #{tile.19} parent=0
    #allocation0 [shape = 'u8[4096]{0}', space=vmem, size = 0x1000, scoped, tag = 'scoped mem for output reshape']
    %v2 = vld [vmem:[%s0] sm:$0x1]
    %vm3 = vcmask 130048
    %4 = vst.msk [vmem:[#allocation0] sm:$0x1] %vm3, %v2
    %s5 = scalar_lea.vmem %s0, 7
    %v6 = vld [vmem:[%s5] sm:$0x1]
    %7 = vrot.lane.b32.xlu0 %v6, 112
    %v8 = vpop.permute.xlu0 %7
    %vm9 = vcmask 1048448
    %10 = vst.msk [vmem:[#allocation0] sm:$0x1] %vm9, %v8
    %s11 = scalar_lea.vmem %s0, 6
    %v12 = vld [vmem:[%s11] sm:$0x1]
    %13 = vrot.lane.b32.xlu0 %v12, 96
    %v14 = vpop.permute.xlu0 %13
    %vm15 = vcmask 917248
    %16 = vst.msk [vmem:[#allocation0] sm:$0x1] %vm15, %v14
    %s17 = scalar_lea.vmem %s0, 5
    %v18 = vld [vmem:[%s17] sm:$0x1]
    %19 = vrot.lane.b32.xlu0 %v18, 80
    %v20 = vpop.permute.xlu0 %19
    %vm21 = vcmask 786048
    %22 = vst.msk [vmem:[#allocation0] sm:$0x1] %vm21, %v20
    %s23 = scalar_lea.vmem %s0, 4
    %v24 = vld [vmem:[%s23] sm:$0x1]
    %25 = vrot.lane.b32.xlu0 %v24, 64
    %v26 = vpop.permute.xlu0 %25
    %vm27 = vcmask 654848
    %28 = vst.msk [vmem:[#allocation0] sm:$0x1] %vm27, %v26
    %s29 = scalar_lea.vmem %s0, 3
    %v30 = vld [vmem:[%s29] sm:$0x1]
    %31 = vrot.lane.b32.xlu0 %v30, 48
    %v32 = vpop.permute.xlu0 %31
    %vm33 = vcmask 523648
    %34 = vst.msk [vmem:[#allocation0] sm:$0x1] %vm33, %v32
    %s35 = scalar_lea.vmem %s0, 2
    %v36 = vld [vmem:[%s35] sm:$0x1]
    %37 = vrot.lane.b32.xlu0 %v36, 32
    %v38 = vpop.permute.xlu0 %37
    %vm39 = vcmask 392448
    %40 = vst.msk [vmem:[#allocation0] sm:$0x1] %vm39, %v38
    %s41 = scalar_lea.vmem %s0, 1
    %v42 = vld [vmem:[%s41] sm:$0x1]
    %43 = vrot.lane.b32.xlu0 %v42, 16
    %v44 = vpop.permute.xlu0 %43
    %vm45 = vcmask 261248
    %46 = vst.msk [vmem:[#allocation0] sm:$0x1] %vm45, %v44
    %s48 = ssub.s32 2, 1
    %v49 = vld [vmem:[#allocation0] sm:%s48]
    %s51 = ssub.s32 2, 1
    %52 = vst [vmem:[%s1] sm:%s51] %v49

// kernel: _lambda_.2
$region0: #{_lambda_.2}
  #allocation0 [shape = 'u32[]', space=smem, size = 0x4, offset = 0x4, fixed_abs, tag = 'smem constant byte address 0x4 - core index']
  #allocation1 [shape = 'u32[72,128]{1,0:T(1,128)}', space=vmem, size = 0x9000, scoped, tag = 'internal scratch']
  %s0 = inlined_call_operand.vmem [shape: f32[2,10,10,4], index: 0, kind: input, shape index: {}]
  %s1 = inlined_call_operand.vmem [shape: bf16[36,16], index: 1, kind: input, shape index: {}]
  %s2 = inlined_call_operand.vmem [shape: bf16[2,64,16], index: 2, kind: output, shape index: {0}]
  %s3 = inlined_call_operand.vmem [shape: f32[2,1,16], index: 3, kind: output, shape index: {1}]
  %s4 = inlined_call_operand.vmem [shape: f32[2,1,16], index: 4, kind: output, shape index: {2}]
  %5 = xla_tuple %s2, %s3, %s4
  %s6 = sld [smem:[#allocation0]]
  $region57: #{_lambda_.2} parent=0
    _
  %s8 = ssub.s32 1, %s6
  %s9 = scalar_select 0, %s8, %s6
  loop: start=0, step=1, limit=4
  $region2: #{_lambda_.2} parent=0 // loop_pre_header
    _
  $region3: #{_lambda_.2} parent=0 // loop_header
    %s11 = sphi 0, %s15
    %p12 = scmp.ge.s32.totalorder %s11, 4
    %s21 = sphi 0, %s23
    %s24 = sphi 0, %s21
    %s25 = sphi 0, %s24
    %s41 = sphi 0, %s25
    %s45 = sphi 0, %s45
    %s47 = sphi 0, %s45
    %s48 = sphi 0, %s47
    %s62 = sphi 0, %s48
    %s68 = sphi 0, %s70
    %s71 = sphi 0, %s68
    %s72 = sphi 0, %s71
    %s88 = sphi 0, %s72
    %s94 = sphi 0, %s96
    %s97 = sphi 0, %s94
    %s98 = sphi 0, %s97
    %s114 = sphi 0, %s98
    %s120 = sphi 0, %s122
    %s123 = sphi 0, %s120
    %s124 = sphi 0, %s123
    %s140 = sphi 0, %s124
  $region4: #{_lambda_.2} parent=0 // loop_header_branch
    %14 = sbr.rel (%p12) target = $region8
  $region5: #{_lambda_.2} parent=0 // loop_body
    %s16 = ssub.s32 %s11, 1
    %s17 = ssub.s32 %s11, 2
    %s18 = sadd.s32 %s11, 1
    %s19 = ssub.s32 %s11, %s18
    %p20 = scmp.eq.s32.totalorder %s19, 0
    %s22 = sadd.s32 %s21, 1
    %s23 = scalar_select %p20, %s21, %s22
    %p26 = pneg %p20
    %p27 = scmp.eq.s32.totalorder %s11, 1
    %p28 = por %p26, %p27
    %p29 = scmp.ne.s32.totalorder %s21, %s24
    %p30 = scmp.eq.s32.totalorder %s11, 0
    %p31 = por %p29, %p30
    %p32 = scmp.ne.s32.totalorder %s21, %s24
    %p33 = scmp.eq.s32.totalorder %s16, 1
    %p34 = por %p32, %p33
    %p35 = scmp.ne.s32.totalorder %s24, %s25
    %p36 = scmp.eq.s32.totalorder %s16, 0
    %p37 = por %p35, %p36
    %p38 = scmp.ne.s32.totalorder %s24, %s25
    %p39 = scmp.eq.s32.totalorder %s17, 1
    %p40 = por %p38, %p39
    %p42 = scmp.ne.s32.totalorder %s25, %s41
    %p43 = scmp.eq.s32.totalorder %s17, 0
    %p44 = por %p42, %p43
    %s46 = sadd.s32 %s45, 1
    %p49 = scmp.eq.s32.totalorder %s11, 1
    %p50 = scmp.ne.s32.totalorder %s45, %s47
    %p51 = scmp.eq.s32.totalorder %s11, 0
    %p52 = por %p50, %p51
    %p53 = scmp.ne.s32.totalorder %s45, %s47
    %p54 = scmp.eq.s32.totalorder %s16, 1
    %p55 = por %p53, %p54
    %p56 = scmp.ne.s32.totalorder %s47, %s48
    %p57 = scmp.eq.s32.totalorder %s16, 0
    %p58 = por %p56, %p57
    %p59 = scmp.ne.s32.totalorder %s47, %s48
    %p60 = scmp.eq.s32.totalorder %s17, 1
    %p61 = por %p59, %p60
    %p63 = scmp.ne.s32.totalorder %s48, %s62
    %p64 = scmp.eq.s32.totalorder %s17, 0
    %p65 = por %p63, %p64
    %s66 = ssub.s32 %s11, %s18
    %p67 = scmp.eq.s32.totalorder %s66, 0
    %s69 = sadd.s32 %s68, 1
    %s70 = scalar_select %p67, %s68, %s69
    %p73 = pneg %p67
    %p74 = scmp.eq.s32.totalorder %s11, 1
    %p75 = por %p73, %p74
    %p76 = scmp.ne.s32.totalorder %s68, %s71
    %p77 = scmp.eq.s32.totalorder %s11, 0
    %p78 = por %p76, %p77
    %p79 = scmp.ne.s32.totalorder %s68, %s71
    %p80 = scmp.eq.s32.totalorder %s16, 1
    %p81 = por %p79, %p80
    %p82 = scmp.ne.s32.totalorder %s71, %s72
    %p83 = scmp.eq.s32.totalorder %s16, 0
    %p84 = por %p82, %p83
    %p85 = scmp.ne.s32.totalorder %s71, %s72
    %p86 = scmp.eq.s32.totalorder %s17, 1
    %p87 = por %p85, %p86
    %p89 = scmp.ne.s32.totalorder %s72, %s88
    %p90 = scmp.eq.s32.totalorder %s17, 0
    %p91 = por %p89, %p90
    %s92 = ssub.s32 %s11, %s18
    %p93 = scmp.eq.s32.totalorder %s92, 0
    %s95 = sadd.s32 %s94, 1
    %s96 = scalar_select %p93, %s94, %s95
    %p99 = pneg %p93
    %p100 = scmp.eq.s32.totalorder %s11, 1
    %p101 = por %p99, %p100
    %p102 = scmp.ne.s32.totalorder %s94, %s97
    %p103 = scmp.eq.s32.totalorder %s11, 0
    %p104 = por %p102, %p103
    %p105 = scmp.ne.s32.totalorder %s94, %s97
    %p106 = scmp.eq.s32.totalorder %s16, 1
    %p107 = por %p105, %p106
    %p108 = scmp.ne.s32.totalorder %s97, %s98
    %p109 = scmp.eq.s32.totalorder %s16, 0
    %p110 = por %p108, %p109
    %p111 = scmp.ne.s32.totalorder %s97, %s98
    %p112 = scmp.eq.s32.totalorder %s17, 1
    %p113 = por %p111, %p112
    %p115 = scmp.ne.s32.totalorder %s98, %s114
    %p116 = scmp.eq.s32.totalorder %s17, 0
    %p117 = por %p115, %p116
    %s118 = ssub.s32 %s11, %s18
    %p119 = scmp.eq.s32.totalorder %s118, 0
    %s121 = sadd.s32 %s120, 1
    %s122 = scalar_select %p119, %s120, %s121
    %p125 = pneg %p119
    %p126 = scmp.eq.s32.totalorder %s11, 1
    %p127 = por %p125, %p126
    %p128 = scmp.ne.s32.totalorder %s120, %s123
    %p129 = scmp.eq.s32.totalorder %s11, 0
    %p130 = por %p128, %p129
    %p131 = scmp.ne.s32.totalorder %s120, %s123
    %p132 = scmp.eq.s32.totalorder %s16, 1
    %p133 = por %p131, %p132
    %p134 = scmp.ne.s32.totalorder %s123, %s124
    %p135 = scmp.eq.s32.totalorder %s16, 0
    %p136 = por %p134, %p135
    %p137 = scmp.ne.s32.totalorder %s123, %s124
    %p138 = scmp.eq.s32.totalorder %s17, 1
    %p139 = por %p137, %p138
    %p141 = scmp.ne.s32.totalorder %s124, %s140
    %p142 = scmp.eq.s32.totalorder %s17, 0
    %p143 = por %p141, %p142
    %p144 = scmp.le.s32.totalorder 1, %s11
    %p145 = scmp.lt.s32.totalorder %s11, 3
    %p146 = pnand %p144, %p145
    %p147 = pneg %p146
    // Predicated region
    $region9: #{_lambda_.2} parent=5 // pred_check
      _
    $region10: #{_lambda_.2} parent=5 // pred_check_branch
      %149 = sbr.rel (%p146) target = $region12
    $region11: #{_lambda_.2} parent=5 // pred_region
      %s150 = ssub.s32 %s11, 1
      // Predicated region
      $region13: #{_lambda_.2} parent=11 // pred_check
        %p151 = pneg %p58
      $region14: #{_lambda_.2} parent=11 // pred_check_branch
        %153 = sbr.rel (%p151) target = $region16
      $region15: #{_lambda_.2} parent=11 // pred_region
        _
      $region16: #{_lambda_.2} parent=11 // pred_fallthru
        _
    $region12: #{_lambda_.2} parent=5 // pred_fallthru
      _
    %p154 = scmp.lt.s32.totalorder %s11, 2
    // Predicated region
    $region17: #{_lambda_.2} parent=5 // pred_check
      %p155 = pneg %p154
    $region18: #{_lambda_.2} parent=5 // pred_check_branch
      %157 = sbr.rel (%p155) target = $region20
    $region19: #{_lambda_.2} parent=5 // pred_region
      // Predicated region
      $region21: #{_lambda_.2} parent=19 // pred_check
        %p158 = pneg %p31
      $region22: #{_lambda_.2} parent=19 // pred_check_branch
        %160 = sbr.rel (%p158) target = $region24
      $region23: #{_lambda_.2} parent=19 // pred_region
        %p161 = scmp.lt.s32.totalorder %s11, 1
        %s162 = scalar_select %p161, %s11, 1
        %s163 = smul.addr %s162, 20
        %s164 = smul.addr %s163, 8
        %s165 = scalar_lea.vmem %s0, %s164
      $region24: #{_lambda_.2} parent=19 // pred_fallthru
        _
    $region20: #{_lambda_.2} parent=5 // pred_fallthru
      _
    %p166 = scmp.le.s32.totalorder 1, %s11
    %p167 = scmp.lt.s32.totalorder %s11, 3
    %p168 = pnand %p166, %p167
    %p169 = pneg %p168
    // Predicated region
    $region25: #{_lambda_.2} parent=5 // pred_check
      _
    $region26: #{_lambda_.2} parent=5 // pred_check_branch
      %171 = sbr.rel (%p168) target = $region28
    $region27: #{_lambda_.2} parent=5 // pred_region
      %s172 = ssub.s32 %s11, 1
      %p173 = scmp.lt.s32.totalorder %s16, 1
      %s174 = scalar_select %p173, %s16, 1
      %s175 = smul.addr %s174, 20
      %s176 = smul.addr %s175, 8
      %s177 = scalar_lea.vmem %s0, %s176
      %p178 = pneg %p37
      %p179 = pneg %p34
      %p180 = pneg %p58
      %p181 = pneg %p55
      %p182 = pneg %p84
      %p183 = pneg %p81
      %p184 = scmp.lt.s32.totalorder %s16, 1
      %s185 = scalar_select %p184, %s16, 1
      %s186 = smul.addr %s185, 8
      %s187 = smul.addr %s186, 4
      %s188 = scalar_lea.vmem %s2, %s187
      %p189 = pneg %p110
      %p190 = pneg %p107
      %p191 = scmp.lt.s32.totalorder %s16, 1
      %s192 = scalar_select %p191, %s16, 1
      %s193 = scalar_lea.vmem %s3, %s192
      %p194 = pneg %p136
      %p195 = pneg %p133
      %p196 = scmp.lt.s32.totalorder %s16, 1
      %s197 = scalar_select %p196, %s16, 1
      %s198 = scalar_lea.vmem %s4, %s197
      %p199 = scmp.lt.s32.totalorder %s16, 1
      %s200 = scalar_select %p199, %s16, 1
      %s201 = smul.addr %s200, 20
      %s202 = smul.addr %s201, 8
      %s203 = scalar_lea.vmem %s0, %s202
      %p204 = scmp.lt.s32.totalorder %s16, 1
      %s205 = scalar_select %p204, %s16, 1
      %s206 = smul.addr %s205, 8
      %s207 = smul.addr %s206, 4
      %s208 = scalar_lea.vmem %s2, %s207
      %p209 = scmp.lt.s32.totalorder %s16, 1
      %s210 = scalar_select %p209, %s16, 1
      %s211 = scalar_lea.vmem %s3, %s210
      %p212 = scmp.lt.s32.totalorder %s16, 1
      %s213 = scalar_select %p212, %s16, 1
      %s214 = scalar_lea.vmem %s4, %s213
      %v216 = vld [vmem:[%s203] sm:$0xff]
      %v217 = vld [vmem:[%s203 + $0x8] sm:$0x3]
      %v218 = vld [vmem:[%s203 + $0x10] sm:$0xff]
      %v219 = vld [vmem:[%s203 + $0x18] sm:$0x3]
      %v220 = vld [vmem:[%s203 + $0x20] sm:$0xff]
      %v221 = vld [vmem:[%s203 + $0x28] sm:$0x3]
      %v222 = vld [vmem:[%s203 + $0x30] sm:$0xff]
      %v223 = vld [vmem:[%s203 + $0x38] sm:$0x3]
      %v224 = vld [vmem:[%s203 + $0x40] sm:$0xff]
      %v225 = vld [vmem:[%s203 + $0x48] sm:$0x3]
      %v226 = vld [vmem:[%s203 + $0x50] sm:$0xff]
      %v227 = vld [vmem:[%s203 + $0x58] sm:$0x3]
      %v228 = vld [vmem:[%s203 + $0x60] sm:$0xff]
      %v229 = vld [vmem:[%s203 + $0x68] sm:$0x3]
      %v230 = vld [vmem:[%s203 + $0x70] sm:$0xff]
      %v231 = vld [vmem:[%s203 + $0x78] sm:$0x3]
      %v232 = vld [vmem:[%s203 + $0x80] sm:$0xff]
      %v233 = vld [vmem:[%s203 + $0x88] sm:$0x3]
      %v234 = vld [vmem:[%s203 + $0x90] sm:$0xff]
      %v235 = vld [vmem:[%s203 + $0x98] sm:$0x3]
      %vm252 = vcmask 1046528
      %v253 = vrot.slane %v216, 1
      %v254 = vrot.slane %v217, 1
      %v255 = vsel %vm252, %v253, %v254
      %v256 = vrot.slane %v218, 1
      %v257 = vrot.slane %v219, 1
      %v258 = vsel %vm252, %v256, %v257
      %v259 = vrot.slane %v220, 1
      %v260 = vrot.slane %v221, 1
      %v261 = vsel %vm252, %v259, %v260
      %v262 = vrot.slane %v222, 1
      %v263 = vrot.slane %v223, 1
      %v264 = vsel %vm252, %v262, %v263
      %v265 = vrot.slane %v224, 1
      %v266 = vrot.slane %v225, 1
      %v267 = vsel %vm252, %v265, %v266
      %v268 = vrot.slane %v226, 1
      %v269 = vrot.slane %v227, 1
      %v270 = vsel %vm252, %v268, %v269
      %v271 = vrot.slane %v228, 1
      %v272 = vrot.slane %v229, 1
      %v273 = vsel %vm252, %v271, %v272
      %v274 = vrot.slane %v230, 1
      %v275 = vrot.slane %v231, 1
      %v276 = vsel %vm252, %v274, %v275
      %vm277 = vcmask 1045504
      %v278 = vrot.slane %v216, 2
      %v279 = vrot.slane %v217, 2
      %v280 = vsel %vm277, %v278, %v279
      %v281 = vrot.slane %v218, 2
      %v282 = vrot.slane %v219, 2
      %v283 = vsel %vm277, %v281, %v282
      %v284 = vrot.slane %v220, 2
      %v285 = vrot.slane %v221, 2
      %v286 = vsel %vm277, %v284, %v285
      %v287 = vrot.slane %v222, 2
      %v288 = vrot.slane %v223, 2
      %v289 = vsel %vm277, %v287, %v288
      %v290 = vrot.slane %v224, 2
      %v291 = vrot.slane %v225, 2
      %v292 = vsel %vm277, %v290, %v291
      %v293 = vrot.slane %v226, 2
      %v294 = vrot.slane %v227, 2
      %v295 = vsel %vm277, %v293, %v294
      %v296 = vrot.slane %v228, 2
      %v297 = vrot.slane %v229, 2
      %v298 = vsel %vm277, %v296, %v297
      %v299 = vrot.slane %v230, 2
      %v300 = vrot.slane %v231, 2
      %v301 = vsel %vm277, %v299, %v300
      %v304 = vrot.slane %v232, 1
      %v305 = vrot.slane %v233, 1
      %v306 = vsel %vm252, %v304, %v305
      %v307 = vrot.slane %v232, 2
      %v308 = vrot.slane %v233, 2
      %v309 = vsel %vm277, %v307, %v308
      %v312 = vrot.slane %v234, 1
      %v313 = vrot.slane %v235, 1
      %v314 = vsel %vm252, %v312, %v313
      %v315 = vrot.slane %v234, 2
      %v316 = vrot.slane %v235, 2
      %v317 = vsel %vm277, %v315, %v316
      %318 = vrot.lane.b32.xlu0 %v255, 4
      %v319 = vpop.permute.xlu0 %318
      %320 = vrot.lane.b32.xlu0 %v258, 4
      %v321 = vpop.permute.xlu0 %320
      %322 = vrot.lane.b32.xlu0 %v261, 4
      %v323 = vpop.permute.xlu0 %322
      %324 = vrot.lane.b32.xlu0 %v264, 4
      %v325 = vpop.permute.xlu0 %324
      %326 = vrot.lane.b32.xlu0 %v267, 4
      %v327 = vpop.permute.xlu0 %326
      %328 = vrot.lane.b32.xlu0 %v270, 4
      %v329 = vpop.permute.xlu0 %328
      %330 = vrot.lane.b32.xlu0 %v273, 4
      %v331 = vpop.permute.xlu0 %330
      %332 = vrot.lane.b32.xlu0 %v276, 4
      %v333 = vpop.permute.xlu0 %332
      %342 = vrot.lane.b32.xlu0 %v280, 8
      %v343 = vpop.permute.xlu0 %342
      %344 = vrot.lane.b32.xlu0 %v283, 8
      %v345 = vpop.permute.xlu0 %344
      %346 = vrot.lane.b32.xlu0 %v286, 8
      %v347 = vpop.permute.xlu0 %346
      %348 = vrot.lane.b32.xlu0 %v289, 8
      %v349 = vpop.permute.xlu0 %348
      %350 = vrot.lane.b32.xlu0 %v292, 8
      %v351 = vpop.permute.xlu0 %350
      %352 = vrot.lane.b32.xlu0 %v295, 8
      %v353 = vpop.permute.xlu0 %352
      %354 = vrot.lane.b32.xlu0 %v298, 8
      %v355 = vpop.permute.xlu0 %354
      %356 = vrot.lane.b32.xlu0 %v301, 8
      %v357 = vpop.permute.xlu0 %356
      %366 = vrot.lane.b32.xlu0 %v218, 12
      %v367 = vpop.permute.xlu0 %366
      %368 = vrot.lane.b32.xlu0 %v220, 12
      %v369 = vpop.permute.xlu0 %368
      %370 = vrot.lane.b32.xlu0 %v222, 12
      %v371 = vpop.permute.xlu0 %370
      %372 = vrot.lane.b32.xlu0 %v224, 12
      %v373 = vpop.permute.xlu0 %372
      %374 = vrot.lane.b32.xlu0 %v226, 12
      %v375 = vpop.permute.xlu0 %374
      %376 = vrot.lane.b32.xlu0 %v228, 12
      %v377 = vpop.permute.xlu0 %376
      %378 = vrot.lane.b32.xlu0 %v230, 12
      %v379 = vpop.permute.xlu0 %378
      %380 = vrot.lane.b32.xlu0 %v232, 12
      %v381 = vpop.permute.xlu0 %380
      %390 = vrot.lane.b32.xlu0 %v258, 16
      %v391 = vpop.permute.xlu0 %390
      %392 = vrot.lane.b32.xlu0 %v261, 16
      %v393 = vpop.permute.xlu0 %392
      %394 = vrot.lane.b32.xlu0 %v264, 16
      %v395 = vpop.permute.xlu0 %394
      %396 = vrot.lane.b32.xlu0 %v267, 16
      %v397 = vpop.permute.xlu0 %396
      %398 = vrot.lane.b32.xlu0 %v270, 16
      %v399 = vpop.permute.xlu0 %398
      %400 = vrot.lane.b32.xlu0 %v273, 16
      %v401 = vpop.permute.xlu0 %400
      %402 = vrot.lane.b32.xlu0 %v276, 16
      %v403 = vpop.permute.xlu0 %402
      %404 = vrot.lane.b32.xlu0 %v306, 16
      %v405 = vpop.permute.xlu0 %404
      %414 = vrot.lane.b32.xlu0 %v283, 20
      %v415 = vpop.permute.xlu0 %414
      %416 = vrot.lane.b32.xlu0 %v286, 20
      %v417 = vpop.permute.xlu0 %416
      %418 = vrot.lane.b32.xlu0 %v289, 20
      %v419 = vpop.permute.xlu0 %418
      %420 = vrot.lane.b32.xlu0 %v292, 20
      %v421 = vpop.permute.xlu0 %420
      %422 = vrot.lane.b32.xlu0 %v295, 20
      %v423 = vpop.permute.xlu0 %422
      %424 = vrot.lane.b32.xlu0 %v298, 20
      %v425 = vpop.permute.xlu0 %424
      %426 = vrot.lane.b32.xlu0 %v301, 20
      %v427 = vpop.permute.xlu0 %426
      %428 = vrot.lane.b32.xlu0 %v309, 20
      %v429 = vpop.permute.xlu0 %428
      %438 = vrot.lane.b32.xlu0 %v220, 24
      %v439 = vpop.permute.xlu0 %438
      %440 = vrot.lane.b32.xlu0 %v222, 24
      %v441 = vpop.permute.xlu0 %440
      %442 = vrot.lane.b32.xlu0 %v224, 24
      %v443 = vpop.permute.xlu0 %442
      %444 = vrot.lane.b32.xlu0 %v226, 24
      %v445 = vpop.permute.xlu0 %444
      %446 = vrot.lane.b32.xlu0 %v228, 24
      %v447 = vpop.permute.xlu0 %446
      %448 = vrot.lane.b32.xlu0 %v230, 24
      %v449 = vpop.permute.xlu0 %448
      %450 = vrot.lane.b32.xlu0 %v232, 24
      %v451 = vpop.permute.xlu0 %450
      %452 = vrot.lane.b32.xlu0 %v234, 24
      %v453 = vpop.permute.xlu0 %452
      %462 = vrot.lane.b32.xlu0 %v261, 28
      %v463 = vpop.permute.xlu0 %462
      %464 = vrot.lane.b32.xlu0 %v264, 28
      %v465 = vpop.permute.xlu0 %464
      %466 = vrot.lane.b32.xlu0 %v267, 28
      %v467 = vpop.permute.xlu0 %466
      %468 = vrot.lane.b32.xlu0 %v270, 28
      %v469 = vpop.permute.xlu0 %468
      %470 = vrot.lane.b32.xlu0 %v273, 28
      %v471 = vpop.permute.xlu0 %470
      %472 = vrot.lane.b32.xlu0 %v276, 28
      %v473 = vpop.permute.xlu0 %472
      %474 = vrot.lane.b32.xlu0 %v306, 28
      %v475 = vpop.permute.xlu0 %474
      %476 = vrot.lane.b32.xlu0 %v314, 28
      %v477 = vpop.permute.xlu0 %476
      %486 = vrot.lane.b32.xlu0 %v286, 32
      %v487 = vpop.permute.xlu0 %486
      %488 = vrot.lane.b32.xlu0 %v289, 32
      %v489 = vpop.permute.xlu0 %488
      %490 = vrot.lane.b32.xlu0 %v292, 32
      %v491 = vpop.permute.xlu0 %490
      %492 = vrot.lane.b32.xlu0 %v295, 32
      %v493 = vpop.permute.xlu0 %492
      %494 = vrot.lane.b32.xlu0 %v298, 32
      %v495 = vpop.permute.xlu0 %494
      %496 = vrot.lane.b32.xlu0 %v301, 32
      %v497 = vpop.permute.xlu0 %496
      %498 = vrot.lane.b32.xlu0 %v309, 32
      %v499 = vpop.permute.xlu0 %498
      %500 = vrot.lane.b32.xlu0 %v317, 32
      %v501 = vpop.permute.xlu0 %500
      %vm510 = vcmask 31744
      %v511 = vsel %vm510, %v216, %v319
      %v512 = vsel %vm510, %v218, %v321
      %v513 = vsel %vm510, %v220, %v323
      %v514 = vsel %vm510, %v222, %v325
      %v515 = vsel %vm510, %v224, %v327
      %v516 = vsel %vm510, %v226, %v329
      %v517 = vsel %vm510, %v228, %v331
      %v518 = vsel %vm510, %v230, %v333
      %vm519 = vcmask 64512
      %v520 = vsel %vm519, %v511, %v343
      %v521 = vsel %vm519, %v512, %v345
      %v522 = vsel %vm519, %v513, %v347
      %v523 = vsel %vm519, %v514, %v349
      %v524 = vsel %vm519, %v515, %v351
      %v525 = vsel %vm519, %v516, %v353
      %v526 = vsel %vm519, %v517, %v355
      %v527 = vsel %vm519, %v518, %v357
      %vm528 = vcmask 97280
      %v529 = vsel %vm528, %v520, %v367
      %v530 = vsel %vm528, %v521, %v369
      %v531 = vsel %vm528, %v522, %v371
      %v532 = vsel %vm528, %v523, %v373
      %v533 = vsel %vm528, %v524, %v375
      %v534 = vsel %vm528, %v525, %v377
      %v535 = vsel %vm528, %v526, %v379
      %v536 = vsel %vm528, %v527, %v381
      %vm537 = vcmask 130048
      %v538 = vsel %vm537, %v529, %v391
      %v539 = vsel %vm537, %v530, %v393
      %v540 = vsel %vm537, %v531, %v395
      %v541 = vsel %vm537, %v532, %v397
      %v542 = vsel %vm537, %v533, %v399
      %v543 = vsel %vm537, %v534, %v401
      %v544 = vsel %vm537, %v535, %v403
      %v545 = vsel %vm537, %v536, %v405
      %vm546 = vcmask 162816
      %v547 = vsel %vm546, %v538, %v415
      %v548 = vsel %vm546, %v539, %v417
      %v549 = vsel %vm546, %v540, %v419
      %v550 = vsel %vm546, %v541, %v421
      %v551 = vsel %vm546, %v542, %v423
      %v552 = vsel %vm546, %v543, %v425
      %v553 = vsel %vm546, %v544, %v427
      %v554 = vsel %vm546, %v545, %v429
      %vm555 = vcmask 195584
      %v556 = vsel %vm555, %v547, %v439
      %v557 = vsel %vm555, %v548, %v441
      %v558 = vsel %vm555, %v549, %v443
      %v559 = vsel %vm555, %v550, %v445
      %v560 = vsel %vm555, %v551, %v447
      %v561 = vsel %vm555, %v552, %v449
      %v562 = vsel %vm555, %v553, %v451
      %v563 = vsel %vm555, %v554, %v453
      %vm564 = vcmask 228352
      %v565 = vsel %vm564, %v556, %v463
      %v566 = vsel %vm564, %v557, %v465
      %v567 = vsel %vm564, %v558, %v467
      %v568 = vsel %vm564, %v559, %v469
      %v569 = vsel %vm564, %v560, %v471
      %v570 = vsel %vm564, %v561, %v473
      %v571 = vsel %vm564, %v562, %v475
      %v572 = vsel %vm564, %v563, %v477
      %vm573 = vcmask 261120
      %v574 = vsel %vm573, %v565, %v487
      %v575 = vsel %vm573, %v566, %v489
      %v576 = vsel %vm573, %v567, %v491
      %v577 = vsel %vm573, %v568, %v493
      %v578 = vsel %vm573, %v569, %v495
      %v579 = vsel %vm573, %v570, %v497
      %v580 = vsel %vm573, %v571, %v499
      %v581 = vsel %vm573, %v572, %v501
      %v582 = vpack.c.bf16 %v575, %v574
      %v583 = vpack.c.bf16 %v577, %v576
      %v584 = vpack.c.bf16 %v579, %v578
      %v585 = vpack.c.bf16 %v581, %v580
      %v586 = vld [vmem:[%s1] sm:$0xf]
      %v587 = vld [vmem:[%s1 + $0x4] sm:$0xf]
      %v588 = vld [vmem:[%s1 + $0x8] sm:$0xf]
      %v589 = vld [vmem:[%s1 + $0xc] sm:$0xf]
      %v590 = vld [vmem:[%s1 + $0x10] sm:$0x3]
      %v596 = vunpack.c.l.b16 %v586
      %v597 = vunpack.c.l.b16 %v587
      %v598 = vunpack.c.l.b16 %v588
      %v599 = vunpack.c.l.b16 %v589
      %v600 = vunpack.c.l.b16 %v590
      %v601 = vpack.c.b16 %v597, %v596
      %v602 = vpack.c.b16 %v599, %v598
      %v603 = vpack.c.b16 %v600, %v600
      %vm606 = vcmask 293888
      %v608 = vsel %vm606, %v582, 0
      %v611 = vsel %vm606, %v583, 0
      %v614 = vsel %vm606, %v584, 0
      %v617 = vsel %vm606, %v585, 0
      %vm619 = vcmask 1041408
      %v621 = vsel %vm619, %v603, 0
      %623 = vmatpush.bf16.msra.mxu0 0
      %624 = vmatpush.bf16.msra.mxu0 0
      %625 = vmatpush.bf16.msra.mxu0 0
      %626 = vmatpush.bf16.msra.mxu0 0
      %627 = vmatpush.bf16.msra.mxu0 0
      %628 = vmatpush.bf16.msra.mxu0 %v621
      %629 = vmatpush.bf16.msra.mxu0 %v602
      %630 = vmatpush.bf16.msra.mxu0 %v601
      %631 = vmatmul.bf16.gmra.mxu0 %v608
      %v632 = vpop.f32.mrf.mxu0
      %v633 = vadd.f32 0.0, %v632
      %v634 = vpop.f32.mrf.mxu0
      %v635 = vadd.f32 0.0, %v634
      %636 = vmatmul.bf16.gmra.mxu0 %v611
      %v637 = vpop.f32.mrf.mxu0
      %v638 = vadd.f32 0.0, %v637
      %v639 = vpop.f32.mrf.mxu0
      %v640 = vadd.f32 0.0, %v639
      %641 = vmatmul.bf16.gmra.mxu0 %v614
      %v642 = vpop.f32.mrf.mxu0
      %v643 = vadd.f32 0.0, %v642
      %v644 = vpop.f32.mrf.mxu0
      %v645 = vadd.f32 0.0, %v644
      %646 = vmatmul.bf16.gmra.mxu0 %v617
      %v647 = vpop.f32.mrf.mxu0
      %v648 = vadd.f32 0.0, %v647
      %v649 = vpop.f32.mrf.mxu0
      %v650 = vadd.f32 0.0, %v649
      %651 = vdwg.mxu0
      %v652 = vsel %vm537, %v633, 0.0
      %v653 = vsel %vm537, %v635, 0.0
      %v654 = vadd.f32 %v652, %v653
      %v655 = vsel %vm537, %v638, 0.0
      %v656 = vadd.f32 %v654, %v655
      %v657 = vsel %vm537, %v640, 0.0
      %v658 = vadd.f32 %v656, %v657
      %v659 = vsel %vm537, %v643, 0.0
      %v660 = vadd.f32 %v658, %v659
      %v661 = vsel %vm537, %v645, 0.0
      %v662 = vadd.f32 %v660, %v661
      %v663 = vsel %vm537, %v648, 0.0
      %v664 = vadd.f32 %v662, %v663
      %v665 = vsel %vm537, %v650, 0.0
      %v666 = vadd.f32 %v664, %v665
      %v667 = vrot.slane %v666, 4
      %v668 = vadd.f32 %v666, %v667
      %v669 = vrot.slane %v668, 2
      %v670 = vadd.f32 %v668, %v669
      %v671 = vrot.slane %v670, 1
      %v672 = vadd.f32 %v670, %v671
      %vm673 = vcmask 122880
      %674 = vst.msk [vmem:[%s211] sm:$0x1] %vm673, %v672
      %v675 = vmul.f32 %v633, %v633
      %v676 = vmul.f32 %v635, %v635
      %v677 = vmul.f32 %v638, %v638
      %v678 = vmul.f32 %v640, %v640
      %v679 = vmul.f32 %v643, %v643
      %v680 = vmul.f32 %v645, %v645
      %v681 = vmul.f32 %v648, %v648
      %v682 = vmul.f32 %v650, %v650
      %v683 = vsel %vm537, %v675, 0.0
      %v684 = vsel %vm537, %v676, 0.0
      %v685 = vadd.f32 %v683, %v684
      %v686 = vsel %vm537, %v677, 0.0
      %v687 = vadd.f32 %v685, %v686
      %v688 = vsel %vm537, %v678, 0.0
      %v689 = vadd.f32 %v687, %v688
      %v690 = vsel %vm537, %v679, 0.0
      %v691 = vadd.f32 %v689, %v690
      %v692 = vsel %vm537, %v680, 0.0
      %v693 = vadd.f32 %v691, %v692
      %v694 = vsel %vm537, %v681, 0.0
      %v695 = vadd.f32 %v693, %v694
      %v696 = vsel %vm537, %v682, 0.0
      %v697 = vadd.f32 %v695, %v696
      %v698 = vrot.slane %v697, 4
      %v699 = vadd.f32 %v697, %v698
      %v700 = vrot.slane %v699, 2
      %v701 = vadd.f32 %v699, %v700
      %v702 = vrot.slane %v701, 1
      %v703 = vadd.f32 %v701, %v702
      %704 = vst.msk [vmem:[%s214] sm:$0x1] %vm673, %v703
      %v705 = vpack.c.bf16 %v633, %v633
      %v706 = vpack.c.bf16 %v635, %v635
      %v707 = vpack.c.bf16 %v638, %v638
      %v708 = vpack.c.bf16 %v640, %v640
      %v709 = vpack.c.bf16 %v643, %v643
      %v710 = vpack.c.bf16 %v645, %v645
      %v711 = vpack.c.bf16 %v648, %v648
      %v712 = vpack.c.bf16 %v650, %v650
      %vm713 = vcmask 125952
      %714 = vst.msk [vmem:[%s208] sm:$0xf] %vm713, %v705
      %715 = vst.msk [vmem:[%s208 + $0x4] sm:$0xf] %vm713, %v706
      %716 = vst.msk [vmem:[%s208 + $0x8] sm:$0xf] %vm713, %v707
      %717 = vst.msk [vmem:[%s208 + $0xc] sm:$0xf] %vm713, %v708
      %718 = vst.msk [vmem:[%s208 + $0x10] sm:$0xf] %vm713, %v709
      %719 = vst.msk [vmem:[%s208 + $0x14] sm:$0xf] %vm713, %v710
      %720 = vst.msk [vmem:[%s208 + $0x18] sm:$0xf] %vm713, %v711
      %721 = vst.msk [vmem:[%s208 + $0x1c] sm:$0xf] %vm713, %v712
      %p722 = scmp.lt.s32.totalorder %s16, 1
      %s723 = scalar_select %p722, %s16, 1
      %s724 = smul.addr %s723, 8
      %s725 = smul.addr %s724, 4
      %s726 = scalar_lea.vmem %s2, %s725
      %p727 = scmp.lt.s32.totalorder %s16, 1
      %s728 = scalar_select %p727, %s16, 1
      %s729 = scalar_lea.vmem %s3, %s728
      %p730 = scmp.lt.s32.totalorder %s16, 1
      %s731 = scalar_select %p730, %s16, 1
      %s732 = scalar_lea.vmem %s4, %s731
      // Predicated region
      $region29: #{_lambda_.2} parent=27 // pred_check
        %p733 = pneg %p81
      $region30: #{_lambda_.2} parent=27 // pred_check_branch
        %735 = sbr.rel (%p733) target = $region32
      $region31: #{_lambda_.2} parent=27 // pred_region
        _
      $region32: #{_lambda_.2} parent=27 // pred_fallthru
        _
      // Predicated region
      $region33: #{_lambda_.2} parent=27 // pred_check
        %p736 = pneg %p107
      $region34: #{_lambda_.2} parent=27 // pred_check_branch
        %738 = sbr.rel (%p736) target = $region36
      $region35: #{_lambda_.2} parent=27 // pred_region
        _
      $region36: #{_lambda_.2} parent=27 // pred_fallthru
        _
      // Predicated region
      $region37: #{_lambda_.2} parent=27 // pred_check
        %p739 = pneg %p133
      $region38: #{_lambda_.2} parent=27 // pred_check_branch
        %741 = sbr.rel (%p739) target = $region40
      $region39: #{_lambda_.2} parent=27 // pred_region
        _
      $region40: #{_lambda_.2} parent=27 // pred_fallthru
        _
    $region28: #{_lambda_.2} parent=5 // pred_fallthru
      _
    %p742 = scmp.le.s32.totalorder 2, %s11
    // Predicated region
    $region41: #{_lambda_.2} parent=5 // pred_check
      %p743 = pneg %p742
    $region42: #{_lambda_.2} parent=5 // pred_check_branch
      %745 = sbr.rel (%p743) target = $region44
    $region43: #{_lambda_.2} parent=5 // pred_region
      %s746 = ssub.s32 %s11, 2
      // Predicated region
      $region45: #{_lambda_.2} parent=43 // pred_check
        %p747 = pneg %p87
      $region46: #{_lambda_.2} parent=43 // pred_check_branch
        %749 = sbr.rel (%p747) target = $region48
      $region47: #{_lambda_.2} parent=43 // pred_region
        %p750 = scmp.lt.s32.totalorder %s17, 1
        %s751 = scalar_select %p750, %s17, 1
        %s752 = smul.addr %s751, 8
        %s753 = smul.addr %s752, 4
        %s754 = scalar_lea.vmem %s2, %s753
      $region48: #{_lambda_.2} parent=43 // pred_fallthru
        _
      // Predicated region
      $region49: #{_lambda_.2} parent=43 // pred_check
        %p755 = pneg %p113
      $region50: #{_lambda_.2} parent=43 // pred_check_branch
        %757 = sbr.rel (%p755) target = $region52
      $region51: #{_lambda_.2} parent=43 // pred_region
        %p758 = scmp.lt.s32.totalorder %s17, 1
        %s759 = scalar_select %p758, %s17, 1
        %s760 = scalar_lea.vmem %s3, %s759
      $region52: #{_lambda_.2} parent=43 // pred_fallthru
        _
      // Predicated region
      $region53: #{_lambda_.2} parent=43 // pred_check
        %p761 = pneg %p139
      $region54: #{_lambda_.2} parent=43 // pred_check_branch
        %763 = sbr.rel (%p761) target = $region56
      $region55: #{_lambda_.2} parent=43 // pred_region
        %p764 = scmp.lt.s32.totalorder %s17, 1
        %s765 = scalar_select %p764, %s17, 1
        %s766 = scalar_lea.vmem %s4, %s765
      $region56: #{_lambda_.2} parent=43 // pred_fallthru
        _
    $region44: #{_lambda_.2} parent=5 // pred_fallthru
      _
  $region6: #{_lambda_.2} parent=0 // loop_footer
    %s15 = sadd.s32 1, %s11
  $region7: #{_lambda_.2} parent=0 // loop_footer_branch
    %10 = sbr.rel target = $region3
  $region8: #{_lambda_.2} parent=0 // loop_exit
    _

// kernel: _lambda_.3
$region0: #{_lambda_.3}
  #allocation0 [shape = 'u32[]', space=smem, size = 0x4, offset = 0x4, fixed_abs, tag = 'smem constant byte address 0x4 - core index']
  #allocation1 [shape = 'u32[72,128]{1,0:T(1,128)}', space=vmem, size = 0x9000, scoped, tag = 'internal scratch']
  %s0 = inlined_call_operand.vmem [shape: bf16[2,8,128], index: 0, kind: input, shape index: {}]
  %s1 = inlined_call_operand.vmem [shape: f32[1,128], index: 1, kind: input, shape index: {}]
  %s2 = inlined_call_operand.vmem [shape: f32[1,128], index: 2, kind: input, shape index: {}]
  %s3 = inlined_call_operand.vmem [shape: f32[2,8,128], index: 3, kind: output, shape index: {}]
  %s4 = sld [smem:[#allocation0]]
  $region45: #{_lambda_.3} parent=0
    _
  %s6 = ssub.s32 1, %s4
  %s7 = scalar_select 0, %s6, %s4
  loop: start=0, step=1, limit=4
  $region2: #{_lambda_.3} parent=0 // loop_pre_header
    _
  $region3: #{_lambda_.3} parent=0 // loop_header
    %s9 = sphi 0, %s13
    %p10 = scmp.ge.s32.totalorder %s9, 4
    %s19 = sphi 0, %s21
    %s22 = sphi 0, %s19
    %s23 = sphi 0, %s22
    %s39 = sphi 0, %s23
    %s43 = sphi 0, %s43
    %s45 = sphi 0, %s43
    %s46 = sphi 0, %s45
    %s60 = sphi 0, %s46
    %s64 = sphi 0, %s64
    %s66 = sphi 0, %s64
    %s67 = sphi 0, %s66
    %s81 = sphi 0, %s67
    %s87 = sphi 0, %s89
    %s90 = sphi 0, %s87
    %s91 = sphi 0, %s90
    %s107 = sphi 0, %s91
  $region4: #{_lambda_.3} parent=0 // loop_header_branch
    %12 = sbr.rel (%p10) target = $region8
  $region5: #{_lambda_.3} parent=0 // loop_body
    %s14 = ssub.s32 %s9, 1
    %s15 = ssub.s32 %s9, 2
    %s16 = sadd.s32 %s9, 1
    %s17 = ssub.s32 %s9, %s16
    %p18 = scmp.eq.s32.totalorder %s17, 0
    %s20 = sadd.s32 %s19, 1
    %s21 = scalar_select %p18, %s19, %s20
    %p24 = pneg %p18
    %p25 = scmp.eq.s32.totalorder %s9, 1
    %p26 = por %p24, %p25
    %p27 = scmp.ne.s32.totalorder %s19, %s22
    %p28 = scmp.eq.s32.totalorder %s9, 0
    %p29 = por %p27, %p28
    %p30 = scmp.ne.s32.totalorder %s19, %s22
    %p31 = scmp.eq.s32.totalorder %s14, 1
    %p32 = por %p30, %p31
    %p33 = scmp.ne.s32.totalorder %s22, %s23
    %p34 = scmp.eq.s32.totalorder %s14, 0
    %p35 = por %p33, %p34
    %p36 = scmp.ne.s32.totalorder %s22, %s23
    %p37 = scmp.eq.s32.totalorder %s15, 1
    %p38 = por %p36, %p37
    %p40 = scmp.ne.s32.totalorder %s23, %s39
    %p41 = scmp.eq.s32.totalorder %s15, 0
    %p42 = por %p40, %p41
    %s44 = sadd.s32 %s43, 1
    %p47 = scmp.eq.s32.totalorder %s9, 1
    %p48 = scmp.ne.s32.totalorder %s43, %s45
    %p49 = scmp.eq.s32.totalorder %s9, 0
    %p50 = por %p48, %p49
    %p51 = scmp.ne.s32.totalorder %s43, %s45
    %p52 = scmp.eq.s32.totalorder %s14, 1
    %p53 = por %p51, %p52
    %p54 = scmp.ne.s32.totalorder %s45, %s46
    %p55 = scmp.eq.s32.totalorder %s14, 0
    %p56 = por %p54, %p55
    %p57 = scmp.ne.s32.totalorder %s45, %s46
    %p58 = scmp.eq.s32.totalorder %s15, 1
    %p59 = por %p57, %p58
    %p61 = scmp.ne.s32.totalorder %s46, %s60
    %p62 = scmp.eq.s32.totalorder %s15, 0
    %p63 = por %p61, %p62
    %s65 = sadd.s32 %s64, 1
    %p68 = scmp.eq.s32.totalorder %s9, 1
    %p69 = scmp.ne.s32.totalorder %s64, %s66
    %p70 = scmp.eq.s32.totalorder %s9, 0
    %p71 = por %p69, %p70
    %p72 = scmp.ne.s32.totalorder %s64, %s66
    %p73 = scmp.eq.s32.totalorder %s14, 1
    %p74 = por %p72, %p73
    %p75 = scmp.ne.s32.totalorder %s66, %s67
    %p76 = scmp.eq.s32.totalorder %s14, 0
    %p77 = por %p75, %p76
    %p78 = scmp.ne.s32.totalorder %s66, %s67
    %p79 = scmp.eq.s32.totalorder %s15, 1
    %p80 = por %p78, %p79
    %p82 = scmp.ne.s32.totalorder %s67, %s81
    %p83 = scmp.eq.s32.totalorder %s15, 0
    %p84 = por %p82, %p83
    %s85 = ssub.s32 %s9, %s16
    %p86 = scmp.eq.s32.totalorder %s85, 0
    %s88 = sadd.s32 %s87, 1
    %s89 = scalar_select %p86, %s87, %s88
    %p92 = pneg %p86
    %p93 = scmp.eq.s32.totalorder %s9, 1
    %p94 = por %p92, %p93
    %p95 = scmp.ne.s32.totalorder %s87, %s90
    %p96 = scmp.eq.s32.totalorder %s9, 0
    %p97 = por %p95, %p96
    %p98 = scmp.ne.s32.totalorder %s87, %s90
    %p99 = scmp.eq.s32.totalorder %s14, 1
    %p100 = por %p98, %p99
    %p101 = scmp.ne.s32.totalorder %s90, %s91
    %p102 = scmp.eq.s32.totalorder %s14, 0
    %p103 = por %p101, %p102
    %p104 = scmp.ne.s32.totalorder %s90, %s91
    %p105 = scmp.eq.s32.totalorder %s15, 1
    %p106 = por %p104, %p105
    %p108 = scmp.ne.s32.totalorder %s91, %s107
    %p109 = scmp.eq.s32.totalorder %s15, 0
    %p110 = por %p108, %p109
    %p111 = scmp.le.s32.totalorder 1, %s9
    %p112 = scmp.lt.s32.totalorder %s9, 3
    %p113 = pnand %p111, %p112
    %p114 = pneg %p113
    // Predicated region
    $region9: #{_lambda_.3} parent=5 // pred_check
      _
    $region10: #{_lambda_.3} parent=5 // pred_check_branch
      %116 = sbr.rel (%p113) target = $region12
    $region11: #{_lambda_.3} parent=5 // pred_region
      %s117 = ssub.s32 %s9, 1
      // Predicated region
      $region13: #{_lambda_.3} parent=11 // pred_check
        %p118 = pneg %p56
      $region14: #{_lambda_.3} parent=11 // pred_check_branch
        %120 = sbr.rel (%p118) target = $region16
      $region15: #{_lambda_.3} parent=11 // pred_region
        _
      $region16: #{_lambda_.3} parent=11 // pred_fallthru
        _
      // Predicated region
      $region17: #{_lambda_.3} parent=11 // pred_check
        %p121 = pneg %p77
      $region18: #{_lambda_.3} parent=11 // pred_check_branch
        %123 = sbr.rel (%p121) target = $region20
      $region19: #{_lambda_.3} parent=11 // pred_region
        _
      $region20: #{_lambda_.3} parent=11 // pred_fallthru
        _
    $region12: #{_lambda_.3} parent=5 // pred_fallthru
      _
    %p124 = scmp.lt.s32.totalorder %s9, 2
    // Predicated region
    $region21: #{_lambda_.3} parent=5 // pred_check
      %p125 = pneg %p124
    $region22: #{_lambda_.3} parent=5 // pred_check_branch
      %127 = sbr.rel (%p125) target = $region24
    $region23: #{_lambda_.3} parent=5 // pred_region
      // Predicated region
      $region25: #{_lambda_.3} parent=23 // pred_check
        %p128 = pneg %p29
      $region26: #{_lambda_.3} parent=23 // pred_check_branch
        %130 = sbr.rel (%p128) target = $region28
      $region27: #{_lambda_.3} parent=23 // pred_region
        %p131 = scmp.lt.s32.totalorder %s9, 1
        %s132 = scalar_select %p131, %s9, 1
        %s133 = smul.addr %s132, 4
        %s134 = scalar_lea.vmem %s0, %s133
      $region28: #{_lambda_.3} parent=23 // pred_fallthru
        _
    $region24: #{_lambda_.3} parent=5 // pred_fallthru
      _
    %p135 = scmp.le.s32.totalorder 1, %s9
    %p136 = scmp.lt.s32.totalorder %s9, 3
    %p137 = pnand %p135, %p136
    %p138 = pneg %p137
    // Predicated region
    $region29: #{_lambda_.3} parent=5 // pred_check
      _
    $region30: #{_lambda_.3} parent=5 // pred_check_branch
      %140 = sbr.rel (%p137) target = $region32
    $region31: #{_lambda_.3} parent=5 // pred_region
      %s141 = ssub.s32 %s9, 1
      %p142 = scmp.lt.s32.totalorder %s14, 1
      %s143 = scalar_select %p142, %s14, 1
      %s144 = smul.addr %s143, 4
      %s145 = scalar_lea.vmem %s0, %s144
      %p146 = pneg %p35
      %p147 = pneg %p32
      %p148 = pneg %p56
      %p149 = pneg %p53
      %p150 = pneg %p77
      %p151 = pneg %p74
      %p152 = pneg %p103
      %p153 = pneg %p100
      %p154 = scmp.lt.s32.totalorder %s14, 1
      %s155 = scalar_select %p154, %s14, 1
      %s156 = smul.addr %s155, 8
      %s157 = scalar_lea.vmem %s3, %s156
      %p158 = scmp.lt.s32.totalorder %s14, 1
      %s159 = scalar_select %p158, %s14, 1
      %s160 = smul.addr %s159, 4
      %s161 = scalar_lea.vmem %s0, %s160
      %p162 = scmp.lt.s32.totalorder %s14, 1
      %s163 = scalar_select %p162, %s14, 1
      %s164 = smul.addr %s163, 8
      %s165 = scalar_lea.vmem %s3, %s164
      %v166 = vld [vmem:[%s161] sm:$0xf]
      %v167 = vunpack.c.l.bf16 %v166
      %v168 = vld [vmem:[%s1] sm:$0x1]
      %v170 = vperm.slane %v168, 0
      %v172 = vmul.f32 %v167, %v170
      %v173 = vld [vmem:[%s2] sm:$0x1]
      %v175 = vperm.slane %v173, 0
      %v177 = vadd.f32 %v172, %v175
      %v178 = vmax.f32 %v177, 0.0
      %179 = vst [vmem:[%s165] sm:$0xff] %v178
      %p180 = scmp.lt.s32.totalorder %s14, 1
      %s181 = scalar_select %p180, %s14, 1
      %s182 = smul.addr %s181, 8
      %s183 = scalar_lea.vmem %s3, %s182
      // Predicated region
      $region33: #{_lambda_.3} parent=31 // pred_check
        %p184 = pneg %p100
      $region34: #{_lambda_.3} parent=31 // pred_check_branch
        %186 = sbr.rel (%p184) target = $region36
      $region35: #{_lambda_.3} parent=31 // pred_region
        _
      $region36: #{_lambda_.3} parent=31 // pred_fallthru
        _
    $region32: #{_lambda_.3} parent=5 // pred_fallthru
      _
    %p187 = scmp.le.s32.totalorder 2, %s9
    // Predicated region
    $region37: #{_lambda_.3} parent=5 // pred_check
      %p188 = pneg %p187
    $region38: #{_lambda_.3} parent=5 // pred_check_branch
      %190 = sbr.rel (%p188) target = $region40
    $region39: #{_lambda_.3} parent=5 // pred_region
      %s191 = ssub.s32 %s9, 2
      // Predicated region
      $region41: #{_lambda_.3} parent=39 // pred_check
        %p192 = pneg %p106
      $region42: #{_lambda_.3} parent=39 // pred_check_branch
        %194 = sbr.rel (%p192) target = $region44
      $region43: #{_lambda_.3} parent=39 // pred_region
        %p195 = scmp.lt.s32.totalorder %s15, 1
        %s196 = scalar_select %p195, %s15, 1
        %s197 = smul.addr %s196, 8
        %s198 = scalar_lea.vmem %s3, %s197
      $region44: #{_lambda_.3} parent=39 // pred_fallthru
        _
    $region40: #{_lambda_.3} parent=5 // pred_fallthru
      _
  $region6: #{_lambda_.3} parent=0 // loop_footer
    %s13 = sadd.s32 1, %s9
  $region7: #{_lambda_.3} parent=0 // loop_footer_branch
    %8 = sbr.rel target = $region3
  $region8: #{_lambda_.3} parent=0 // loop_exit
    _

</llo_original>
